<compile_context>
chip_gen: v7x
topology: tpu7x:2x2x1
jax: 0.10.0
libtpu: 0.0.40
codegen_flags: <defaults>
</compile_context>

<pallas_src>
import functools

import numpy as np
import jax
import jax.numpy as jnp
from jax.experimental import pallas as pl
from jax.experimental.pallas import tpu as pltpu


# ---------------------------------------------------------------------------
# Deterministic parameter construction (mirrors StructuredConnection.__init__)
# ---------------------------------------------------------------------------
def _structured_sparse_weight(rng, in_features, out_features, sparsity):
    """Replicates StructuredConnection._initialize_structured_sparsity.

    Returns the *effective* weight (weight * mask, shape [out, in]) and bias [out].
    """
    weight = np.zeros((out_features, in_features), dtype=np.float32)
    mask = np.zeros((out_features, in_features), dtype=np.float32)
    num_connections = int((1.0 - sparsity) * in_features * out_features)
    connections_per_neuron = max(1, num_connections // out_features)
    scale = np.sqrt(2.0 / connections_per_neuron)
    for i in range(out_features):
        start_idx = (i * connections_per_neuron) % in_features
        for j in range(connections_per_neuron):
            in_idx = (start_idx + j) % in_features
            mask[i, in_idx] = 1.0
            weight[i, in_idx] = rng.standard_normal() * scale
    bias = np.zeros((out_features,), dtype=np.float32)  # nn.Parameter(torch.zeros(out))
    return weight * mask, bias


# TODO(synk): SparseLinear's definition is not provided in the reference source;
# it is modeled as a masked linear layer with the same structured-sparsity
# initialization as StructuredConnection (identical forward: x @ (W*M)^T + b).
def build_fiber_bundle_params(base_dim, fiber_dim, initial_sparsity, seed=0):
    rng = np.random.default_rng(seed)
    fiber_w, fiber_b = [], []
    conn_w, conn_b = [], []
    for layer_idx in range(base_dim):
        w, b = _structured_sparse_weight(rng, fiber_dim, fiber_dim, initial_sparsity)
        fiber_w.append(w)
        fiber_b.append(b)
        if layer_idx < base_dim - 1:
            w, b = _structured_sparse_weight(rng, fiber_dim, fiber_dim, initial_sparsity)
            conn_w.append(w)
            conn_b.append(b)
    # Pre-transpose to (in, out) so the kernel does h @ W + b == F.linear(h, W_eff, b).
    fiber_w_t = jnp.asarray(np.stack([w.T for w in fiber_w]))            # [L, D, D]
    fiber_b = jnp.asarray(np.stack(fiber_b))                              # [L, D]
    if conn_w:
        conn_w_t = jnp.asarray(np.stack([w.T for w in conn_w]))           # [L-1, D, D]
        conn_b = jnp.asarray(np.stack(conn_b))                            # [L-1, D]
    else:  # base_dim == 1: no connections
        conn_w_t = jnp.zeros((0, fiber_dim, fiber_dim), jnp.float32)
        conn_b = jnp.zeros((0, fiber_dim), jnp.float32)
    return fiber_w_t, fiber_b, conn_w_t, conn_b


def _round_up(x, m):
    return ((x + m - 1) // m) * m


# ---------------------------------------------------------------------------
# One-time parameter packing: pad fiber_dim to a lane-dense multiple of 128 and
# cast weights to the compute dtype.  Done once, outside the per-call hot path.
# Zero-padded columns/rows stay exactly zero through masked-linear + zero bias
# + relu, so the valid D columns are unchanged.
# ---------------------------------------------------------------------------
def prepare_kernel_params(fiber_w_t, fiber_b, conn_w_t, conn_b,
                          compute_dtype=jnp.bfloat16):
    L, D, _ = fiber_w_t.shape
    Dp = max(128, _round_up(D, 128))
    pad_d = Dp - D
    fw = jnp.pad(fiber_w_t.astype(jnp.float32),
                 ((0, 0), (0, pad_d), (0, pad_d))).astype(compute_dtype)
    fb = jnp.pad(fiber_b.astype(jnp.float32), ((0, 0), (0, pad_d)))      # f32 biases
    if L > 1:
        cw = jnp.pad(conn_w_t.astype(jnp.float32),
                     ((0, 0), (0, pad_d), (0, pad_d))).astype(compute_dtype)
        cb = jnp.pad(conn_b.astype(jnp.float32), ((0, 0), (0, pad_d)))
    else:
        # base_dim == 1: dummy (never-read) connection tensors keep a non-zero
        # leading dim for the BlockSpecs.
        cw = jnp.zeros((1, Dp, Dp), compute_dtype)
        cb = jnp.zeros((1, Dp), jnp.float32)
    return {"fw": fw, "fb": fb, "cw": cw, "cb": cb,
            "D": D, "Dp": Dp, "L": L, "compute_dtype": compute_dtype}


# ---------------------------------------------------------------------------
# Pallas kernel: the full parallel-transport chain (matmul + bias + relu) per
# batch tile, all layers fused and resident in VMEM.
# ---------------------------------------------------------------------------
def fiber_bundle_kernel(fw_ref, fb_ref, cw_ref, cb_ref, x_ref, o_ref, *,
                        num_layers, compute_dtype):
    # Hoist bias loads: single VMEM load each, static indexing per layer.
    fb = fb_ref[...]                                  # (L, Dp)  f32
    cb = cb_ref[...]                                  # (max(L-1,1), Dp) f32

    def affine(h, w, b_row):
        # bf16 (or f32) operands on the MXU, f32 accumulation; bias add on the
        # f32 accumulator (keeps v5e happy: no bf16 VPU needed).
        return jnp.dot(h.astype(compute_dtype), w,
                       preferred_element_type=jnp.float32) + b_row[None, :]

    h = x_ref[...]                                    # (tb, Dp)
    # Static unroll is fine for small base_dim.
    # TODO(synk): if base_dim grows large (>~8-16), switch to
    # lax.fori_loop(..., unroll=True) with dynamic fw_ref[i]/cw_ref[i] indexing
    # to bound instruction-stream / vreg live-range blowup.
    for i in range(num_layers - 1):
        h = affine(h, fw_ref[i], fb[i])               # fiber[i]
        h = affine(h, cw_ref[i], cb[i])               # connection[i]
        h = jnp.maximum(h, 0.0)                       # relu (f32)
    h = affine(h, fw_ref[num_layers - 1], fb[num_layers - 1])  # fiber[-1], no relu
    o_ref[...] = h.astype(o_ref.dtype)


def _default_block_b(B, target_cores, row_mult):
    B_r = _round_up(B, row_mult)
    if target_cores <= 1:
        # v5e/v6e: single TensorCore -> grid is a serial loop; collapse small
        # batches to one step, only tile once tiles hit the 512-1024 sweet spot.
        return B_r if B_r <= 1024 else 512
    # v7x: 2 TensorCores -> balanced even split of the batch.
    n_steps = max(2, target_cores)
    return max(row_mult, _round_up(pl.cdiv(B_r, n_steps), row_mult))


def fiber_bundle_forward(x, params, *, block_b=None, target_cores=1):
    B, D = x.shape
    assert D == params["D"], "x feature dim must equal fiber_dim"
    Dp, L = params["Dp"], params["L"]
    fw, fb, cw, cb = params["fw"], params["fb"], params["cw"], params["cb"]
    compute_dtype = params["compute_dtype"]
    Lc = cw.shape[0]
    out_dtype = x.dtype

    # bf16 activations want a (16,128) tile -> batch tile multiple of 16.
    row_mult = 16 if compute_dtype == jnp.bfloat16 else 8
    if block_b is None:
        block_b = _default_block_b(B, target_cores, row_mult)
    block_b = _round_up(block_b, row_mult)
    Bp = _round_up(max(B, block_b), block_b)

    pad_d = Dp - D
    pad_b = Bp - B
    if pad_d or pad_b:
        # Cast + pad in one wrapper pass (padded columns/rows are zeros; padded
        # batch rows are sliced off below).
        x_in = jnp.pad(x.astype(compute_dtype), ((0, pad_b), (0, pad_d)))
    else:
        # Fast path: no extra HBM pad/slice passes; kernel casts in-register.
        x_in = x

    grid = (Bp // block_b,)

    # Advisory cost for XLA's scheduler.
    n_mm = 2 * L - 1
    flops = 2 * Bp * Dp * Dp * n_mm
    w_bytes = sum(int(a.size) * a.dtype.itemsize for a in (fw, fb, cw, cb))
    io_bytes = Bp * Dp * (jnp.dtype(x_in.dtype).itemsize + jnp.dtype(out_dtype).itemsize)
    cost = pl.CostEstimate(flops=int(flops), transcendentals=0,
                           bytes_accessed=int(w_bytes + io_bytes))

    # VMEM budget: double-buffered weights + activation tiles + f32 intermediates.
    blk_io = block_b * Dp * (jnp.dtype(x_in.dtype).itemsize + jnp.dtype(out_dtype).itemsize)
    vmem_need = 2 * (w_bytes + blk_io) + 8 * block_b * Dp * 4
    vmem_limit = int(min(max(vmem_need * 5 // 4, 16 * 1024 * 1024), 128 * 1024 * 1024))

    kernel = functools.partial(fiber_bundle_kernel, num_layers=L,
                               compute_dtype=compute_dtype)
    out_p = pl.pallas_call(
        kernel,
        out_shape=jax.ShapeDtypeStruct((Bp, Dp), out_dtype),
        grid=grid,
        in_specs=[
            # Weights / biases: constant block index -> resident in VMEM,
            # never re-fetched across grid steps.
            pl.BlockSpec((L, Dp, Dp), lambda b: (0, 0, 0)),
            pl.BlockSpec((L, Dp), lambda b: (0, 0)),
            pl.BlockSpec((Lc, Dp, Dp), lambda b: (0, 0, 0)),
            pl.BlockSpec((Lc, Dp), lambda b: (0, 0)),
            # Activations tiled over the batch grid.
            pl.BlockSpec((block_b, Dp), lambda b: (b, 0)),
        ],
        out_specs=pl.BlockSpec((block_b, Dp), lambda b: (b, 0)),
        compiler_params=pltpu.CompilerParams(
            dimension_semantics=("parallel",),
            vmem_limit_bytes=vmem_limit),
        cost_estimate=cost,
    )(fw, fb, cw, cb, x_in)

    if pad_d or pad_b:
        return out_p[:B, :D]
    return out_p


# ---------------------------------------------------------------------------
# Pure-JAX reference (mirrors the PyTorch forward exactly) for validation.
# compute_dtype lets us build a numerically matched (bf16-quantized) reference.
# ---------------------------------------------------------------------------
def fiber_bundle_reference(x, fiber_w_t, fiber_b, conn_w_t, conn_b,
                           compute_dtype=jnp.float32):
    L = fiber_w_t.shape[0]

    def affine(h, w, b):
        return jnp.dot(h.astype(compute_dtype), w.astype(compute_dtype),
                       preferred_element_type=jnp.float32) + b.astype(jnp.float32)

    h = x.astype(jnp.float32)
    for i in range(L - 1):
        h = affine(h, fiber_w_t[i], fiber_b[i])
        h = affine(h, conn_w_t[i], conn_b[i])
        h = jnp.maximum(h, 0.0)
    h = affine(h, fiber_w_t[L - 1], fiber_b[L - 1])
    return h.astype(x.dtype)


def _check(out, x, fiber_w_t, fiber_b, conn_w_t, conn_b):
    # 1) Numerically matched (same bf16 quantization points) -> tight tolerance.
    ref_match = fiber_bundle_reference(x, fiber_w_t, fiber_b, conn_w_t, conn_b,
                                       compute_dtype=jnp.bfloat16)
    np.testing.assert_allclose(np.asarray(out), np.asarray(ref_match),
                               rtol=1e-2, atol=1e-2)
    # 2) Full-f32 reference -> semantics check with scale-relative tolerance
    #    (bf16 weights/activations are not bit-identical to f32).
    ref_f32 = fiber_bundle_reference(x, fiber_w_t, fiber_b, conn_w_t, conn_b,
                                     compute_dtype=jnp.float32)
    max_err = float(jnp.max(jnp.abs(out.astype(jnp.float32) -
                                    ref_f32.astype(jnp.float32))))
    scale = float(jnp.max(jnp.abs(ref_f32.astype(jnp.float32))))
    assert max_err <= 0.05 * scale + 1e-5, f"max_err={max_err} vs scale={scale}"


if __name__ == "__main__":
    # Small config consistent with FiberBundleConfig(base_dim, fiber_dim, ...)
    base_dim = 4          # number of fibers (layers); base_dim - 1 connections
    fiber_dim = 32        # activation dimension of each fiber
    initial_sparsity = 0.02

    fiber_w_t, fiber_b, conn_w_t, conn_b = build_fiber_bundle_params(
        base_dim, fiber_dim, initial_sparsity, seed=0)
    params = prepare_kernel_params(fiber_w_t, fiber_b, conn_w_t, conn_b,
                                   compute_dtype=jnp.bfloat16)

    key = jax.random.PRNGKey(0)
    k1, k2 = jax.random.split(key)

    # Case 1: small batch -> single grid step (v5e/v6e-friendly default).
    x1 = jax.random.normal(k1, (16, fiber_dim), dtype=jnp.float32)
    out1 = jax.block_until_ready(fiber_bundle_forward(x1, params))
    assert out1.shape == (16, fiber_dim) and out1.dtype == x1.dtype
    _check(out1, x1, fiber_w_t, fiber_b, conn_w_t, conn_b)

    # Case 2: multi-step grid + batch-remainder padding (v7x-style split).
    x2 = jax.random.normal(k2, (40, fiber_dim), dtype=jnp.float32)
    out2 = jax.block_until_ready(
        fiber_bundle_forward(x2, params, block_b=16, target_cores=2))
    assert out2.shape == (40, fiber_dim) and out2.dtype == x2.dtype
    _check(out2, x2, fiber_w_t, fiber_b, conn_w_t, conn_b)

    print("KERNEL_OK")
</pallas_src>

<mosaic_0001>
module attributes {stable_mosaic.version = 11 : i64} {
  func.func @fiber_bundle_kernel(%arg0: i32, %arg1: memref<4x128x128xbf16, #tpu.memory_space<vmem>>, %arg2: memref<4x128xf32, #tpu.memory_space<vmem>>, %arg3: memref<3x128x128xbf16, #tpu.memory_space<vmem>>, %arg4: memref<3x128xf32, #tpu.memory_space<vmem>>, %arg5: memref<16x128xbf16, #tpu.memory_space<vmem>>, %arg6: memref<16x128xf32, #tpu.memory_space<vmem>>) attributes {dimension_semantics = [#tpu.dimension_semantics<parallel>], iteration_bounds = array<i64: 1>, scalar_prefetch = 0 : i64, scratch_operands = 0 : i64, tpu.core_type = #tpu.core_type<tc>, window_params = [{pipeline_mode = #tpu.pipeline_mode<synchronous>, transform_indices = @transform_0, window_bounds = array<i64: 4, 128, 128>}, {pipeline_mode = #tpu.pipeline_mode<synchronous>, transform_indices = @transform_1, window_bounds = array<i64: 4, 128>}, {pipeline_mode = #tpu.pipeline_mode<synchronous>, transform_indices = @transform_2, window_bounds = array<i64: 3, 128, 128>}, {pipeline_mode = #tpu.pipeline_mode<synchronous>, transform_indices = @transform_3, window_bounds = array<i64: 3, 128>}, {transform_indices = @transform_4, window_bounds = array<i64: 16, 128>}, {transform_indices = @transform_5, window_bounds = array<i64: 16, 128>}]} {
    %c0 = arith.constant 0 : index
    %c0_0 = arith.constant 0 : index
    %0 = vector.load %arg2[%c0, %c0_0] : memref<4x128xf32, #tpu.memory_space<vmem>>, vector<4x128xf32>
    %c0_1 = arith.constant 0 : index
    %c0_2 = arith.constant 0 : index
    %1 = vector.load %arg4[%c0_1, %c0_2] : memref<3x128xf32, #tpu.memory_space<vmem>>, vector<3x128xf32>
    %c0_3 = arith.constant 0 : index
    %c0_4 = arith.constant 0 : index
    %2 = vector.load %arg5[%c0_3, %c0_4] : memref<16x128xbf16, #tpu.memory_space<vmem>>, vector<16x128xbf16>
    %c0_5 = arith.constant 0 : index
    %c0_6 = arith.constant 0 : index
    %c0_7 = arith.constant 0 : index
    %3 = vector.load %arg1[%c0_5, %c0_6, %c0_7] : memref<4x128x128xbf16, #tpu.memory_space<vmem>>, vector<1x128x128xbf16>
    %4 = vector.shape_cast %3 : vector<1x128x128xbf16> to vector<128x128xbf16>
    %5 = vector.extract_strided_slice %0 {offsets = [0, 0], sizes = [1, 128], strides = [1, 1]} : vector<4x128xf32> to vector<1x128xf32>
    %6 = vector.shape_cast %5 : vector<1x128xf32> to vector<128xf32>
    %cst = arith.constant dense<0.000000e+00> : vector<16x128xf32>
    %7 = tpu.matmul %2, %4, %cst {dimension_numbers = #tpu.dot_dimension_numbers<[1], [0], [0], [1], [0, 0, 1, 1], [], []>} : vector<16x128xbf16>, vector<128x128xbf16>, vector<16x128xf32> -> vector<16x128xf32>
    %8 = vector.shape_cast %6 : vector<128xf32> to vector<1x128xf32>
    %9 = vector.broadcast %8 : vector<1x128xf32> to vector<16x128xf32>
    %10 = arith.addf %7, %9 : vector<16x128xf32>
    %c0_8 = arith.constant 0 : index
    %c0_9 = arith.constant 0 : index
    %c0_10 = arith.constant 0 : index
    %11 = vector.load %arg3[%c0_8, %c0_9, %c0_10] : memref<3x128x128xbf16, #tpu.memory_space<vmem>>, vector<1x128x128xbf16>
    %12 = vector.shape_cast %11 : vector<1x128x128xbf16> to vector<128x128xbf16>
    %13 = vector.extract_strided_slice %1 {offsets = [0, 0], sizes = [1, 128], strides = [1, 1]} : vector<3x128xf32> to vector<1x128xf32>
    %14 = vector.shape_cast %13 : vector<1x128xf32> to vector<128xf32>
    %15 = arith.truncf %10 : vector<16x128xf32> to vector<16x128xbf16>
    %cst_11 = arith.constant dense<0.000000e+00> : vector<16x128xf32>
    %16 = tpu.matmul %15, %12, %cst_11 {dimension_numbers = #tpu.dot_dimension_numbers<[1], [0], [0], [1], [0, 0, 1, 1], [], []>} : vector<16x128xbf16>, vector<128x128xbf16>, vector<16x128xf32> -> vector<16x128xf32>
    %17 = vector.shape_cast %14 : vector<128xf32> to vector<1x128xf32>
    %18 = vector.broadcast %17 : vector<1x128xf32> to vector<16x128xf32>
    %19 = arith.addf %16, %18 : vector<16x128xf32>
    %cst_12 = arith.constant 0.000000e+00 : f32
    %20 = vector.broadcast %cst_12 : f32 to vector<16x128xf32>
    %21 = arith.maximumf %19, %20 : vector<16x128xf32>
    %c1 = arith.constant 1 : index
    %c0_13 = arith.constant 0 : index
    %c0_14 = arith.constant 0 : index
    %22 = vector.load %arg1[%c1, %c0_13, %c0_14] : memref<4x128x128xbf16, #tpu.memory_space<vmem>>, vector<1x128x128xbf16>
    %23 = vector.shape_cast %22 : vector<1x128x128xbf16> to vector<128x128xbf16>
    %24 = vector.extract_strided_slice %0 {offsets = [1, 0], sizes = [1, 128], strides = [1, 1]} : vector<4x128xf32> to vector<1x128xf32>
    %25 = vector.shape_cast %24 : vector<1x128xf32> to vector<128xf32>
    %26 = arith.truncf %21 : vector<16x128xf32> to vector<16x128xbf16>
    %cst_15 = arith.constant dense<0.000000e+00> : vector<16x128xf32>
    %27 = tpu.matmul %26, %23, %cst_15 {dimension_numbers = #tpu.dot_dimension_numbers<[1], [0], [0], [1], [0, 0, 1, 1], [], []>} : vector<16x128xbf16>, vector<128x128xbf16>, vector<16x128xf32> -> vector<16x128xf32>
    %28 = vector.shape_cast %25 : vector<128xf32> to vector<1x128xf32>
    %29 = vector.broadcast %28 : vector<1x128xf32> to vector<16x128xf32>
    %30 = arith.addf %27, %29 : vector<16x128xf32>
    %c1_16 = arith.constant 1 : index
    %c0_17 = arith.constant 0 : index
    %c0_18 = arith.constant 0 : index
    %31 = vector.load %arg3[%c1_16, %c0_17, %c0_18] : memref<3x128x128xbf16, #tpu.memory_space<vmem>>, vector<1x128x128xbf16>
    %32 = vector.shape_cast %31 : vector<1x128x128xbf16> to vector<128x128xbf16>
    %33 = vector.extract_strided_slice %1 {offsets = [1, 0], sizes = [1, 128], strides = [1, 1]} : vector<3x128xf32> to vector<1x128xf32>
    %34 = vector.shape_cast %33 : vector<1x128xf32> to vector<128xf32>
    %35 = arith.truncf %30 : vector<16x128xf32> to vector<16x128xbf16>
    %cst_19 = arith.constant dense<0.000000e+00> : vector<16x128xf32>
    %36 = tpu.matmul %35, %32, %cst_19 {dimension_numbers = #tpu.dot_dimension_numbers<[1], [0], [0], [1], [0, 0, 1, 1], [], []>} : vector<16x128xbf16>, vector<128x128xbf16>, vector<16x128xf32> -> vector<16x128xf32>
    %37 = vector.shape_cast %34 : vector<128xf32> to vector<1x128xf32>
    %38 = vector.broadcast %37 : vector<1x128xf32> to vector<16x128xf32>
    %39 = arith.addf %36, %38 : vector<16x128xf32>
    %cst_20 = arith.constant 0.000000e+00 : f32
    %40 = vector.broadcast %cst_20 : f32 to vector<16x128xf32>
    %41 = arith.maximumf %39, %40 : vector<16x128xf32>
    %c2 = arith.constant 2 : index
    %c0_21 = arith.constant 0 : index
    %c0_22 = arith.constant 0 : index
    %42 = vector.load %arg1[%c2, %c0_21, %c0_22] : memref<4x128x128xbf16, #tpu.memory_space<vmem>>, vector<1x128x128xbf16>
    %43 = vector.shape_cast %42 : vector<1x128x128xbf16> to vector<128x128xbf16>
    %44 = vector.extract_strided_slice %0 {offsets = [2, 0], sizes = [1, 128], strides = [1, 1]} : vector<4x128xf32> to vector<1x128xf32>
    %45 = vector.shape_cast %44 : vector<1x128xf32> to vector<128xf32>
    %46 = arith.truncf %41 : vector<16x128xf32> to vector<16x128xbf16>
    %cst_23 = arith.constant dense<0.000000e+00> : vector<16x128xf32>
    %47 = tpu.matmul %46, %43, %cst_23 {dimension_numbers = #tpu.dot_dimension_numbers<[1], [0], [0], [1], [0, 0, 1, 1], [], []>} : vector<16x128xbf16>, vector<128x128xbf16>, vector<16x128xf32> -> vector<16x128xf32>
    %48 = vector.shape_cast %45 : vector<128xf32> to vector<1x128xf32>
    %49 = vector.broadcast %48 : vector<1x128xf32> to vector<16x128xf32>
    %50 = arith.addf %47, %49 : vector<16x128xf32>
    %c2_24 = arith.constant 2 : index
    %c0_25 = arith.constant 0 : index
    %c0_26 = arith.constant 0 : index
    %51 = vector.load %arg3[%c2_24, %c0_25, %c0_26] : memref<3x128x128xbf16, #tpu.memory_space<vmem>>, vector<1x128x128xbf16>
    %52 = vector.shape_cast %51 : vector<1x128x128xbf16> to vector<128x128xbf16>
    %53 = vector.extract_strided_slice %1 {offsets = [2, 0], sizes = [1, 128], strides = [1, 1]} : vector<3x128xf32> to vector<1x128xf32>
    %54 = vector.shape_cast %53 : vector<1x128xf32> to vector<128xf32>
    %55 = arith.truncf %50 : vector<16x128xf32> to vector<16x128xbf16>
    %cst_27 = arith.constant dense<0.000000e+00> : vector<16x128xf32>
    %56 = tpu.matmul %55, %52, %cst_27 {dimension_numbers = #tpu.dot_dimension_numbers<[1], [0], [0], [1], [0, 0, 1, 1], [], []>} : vector<16x128xbf16>, vector<128x128xbf16>, vector<16x128xf32> -> vector<16x128xf32>
    %57 = vector.shape_cast %54 : vector<128xf32> to vector<1x128xf32>
    %58 = vector.broadcast %57 : vector<1x128xf32> to vector<16x128xf32>
    %59 = arith.addf %56, %58 : vector<16x128xf32>
    %cst_28 = arith.constant 0.000000e+00 : f32
    %60 = vector.broadcast %cst_28 : f32 to vector<16x128xf32>
    %61 = arith.maximumf %59, %60 : vector<16x128xf32>
    %c3 = arith.constant 3 : index
    %c0_29 = arith.constant 0 : index
    %c0_30 = arith.constant 0 : index
    %62 = vector.load %arg1[%c3, %c0_29, %c0_30] : memref<4x128x128xbf16, #tpu.memory_space<vmem>>, vector<1x128x128xbf16>
    %63 = vector.shape_cast %62 : vector<1x128x128xbf16> to vector<128x128xbf16>
    %64 = vector.extract_strided_slice %0 {offsets = [3, 0], sizes = [1, 128], strides = [1, 1]} : vector<4x128xf32> to vector<1x128xf32>
    %65 = vector.shape_cast %64 : vector<1x128xf32> to vector<128xf32>
    %66 = arith.truncf %61 : vector<16x128xf32> to vector<16x128xbf16>
    %cst_31 = arith.constant dense<0.000000e+00> : vector<16x128xf32>
    %67 = tpu.matmul %66, %63, %cst_31 {dimension_numbers = #tpu.dot_dimension_numbers<[1], [0], [0], [1], [0, 0, 1, 1], [], []>} : vector<16x128xbf16>, vector<128x128xbf16>, vector<16x128xf32> -> vector<16x128xf32>
    %68 = vector.shape_cast %65 : vector<128xf32> to vector<1x128xf32>
    %69 = vector.broadcast %68 : vector<1x128xf32> to vector<16x128xf32>
    %70 = arith.addf %67, %69 : vector<16x128xf32>
    %c0_32 = arith.constant 0 : index
    %c0_33 = arith.constant 0 : index
    %71 = vector.load %arg6[%c0_32, %c0_33] : memref<16x128xf32, #tpu.memory_space<vmem>>, vector<16x128xf32>
    tpu.vector_store %arg6[%c0_32, %c0_33], %70 {strides = array<i32>} : memref<16x128xf32, #tpu.memory_space<vmem>>, vector<16x128xf32>,
    return
  }
  func.func @transform_0(%arg0: i32) -> (i32, i32, i32) {
    %c0_i32 = arith.constant 0 : i32
    %c0_i32_0 = arith.constant 0 : i32
    %c0_i32_1 = arith.constant 0 : i32
    %c0_i32_2 = arith.constant 0 : i32
    return %c0_i32, %c0_i32_0, %c0_i32_1 : i32, i32, i32
  }
  func.func @transform_1(%arg0: i32) -> (i32, i32) {
    %c0_i32 = arith.constant 0 : i32
    %c0_i32_0 = arith.constant 0 : i32
    %c0_i32_1 = arith.constant 0 : i32
    return %c0_i32, %c0_i32_0 : i32, i32
  }
  func.func @transform_2(%arg0: i32) -> (i32, i32, i32) {
    %c0_i32 = arith.constant 0 : i32
    %c0_i32_0 = arith.constant 0 : i32
    %c0_i32_1 = arith.constant 0 : i32
    %c0_i32_2 = arith.constant 0 : i32
    return %c0_i32, %c0_i32_0, %c0_i32_1 : i32, i32, i32
  }
  func.func @transform_3(%arg0: i32) -> (i32, i32) {
    %c0_i32 = arith.constant 0 : i32
    %c0_i32_0 = arith.constant 0 : i32
    %c0_i32_1 = arith.constant 0 : i32
    return %c0_i32, %c0_i32_0 : i32, i32
  }
  func.func @transform_4(%arg0: i32) -> (i32, i32) {
    %c0_i32 = arith.constant 0 : i32
    %c0_i32_0 = arith.constant 0 : i32
    return %arg0, %c0_i32 : i32, i32
  }
  func.func @transform_5(%arg0: i32) -> (i32, i32) {
    %c0_i32 = arith.constant 0 : i32
    %c0_i32_0 = arith.constant 0 : i32
    return %arg0, %c0_i32 : i32, i32
  }
}

</mosaic_0001>

<llo_original>
// kernel: tpu_custom_call.1
$region0: #{tpu_custom_call.1}
  #allocation0 [shape = 'u32[]', space=smem, size = 0x4, offset = 0x4, fixed_abs, tag = 'smem constant byte address 0x4 - core index']
  #allocation1 [shape = 'u32[144,128]{1,0:T(1,128)}', space=vmem, size = 0x12000, scoped, tag = 'internal scratch']
  %s0 = inlined_call_operand.hbm [shape: bf16[4,128,128], index: 0, kind: input, shape index: {}]
  %s1 = inlined_call_operand.hbm [shape: f32[4,128], index: 1, kind: input, shape index: {}]
  %s2 = inlined_call_operand.hbm [shape: bf16[3,128,128], index: 2, kind: input, shape index: {}]
  %s3 = inlined_call_operand.vmem [shape: f32[3,128], index: 3, kind: input, shape index: {}]
  %s4 = inlined_call_operand.vmem [shape: bf16[16,128], index: 4, kind: input, shape index: {}]
  %s5 = inlined_call_operand.hbm [shape: f32[16,128], index: 5, kind: output, shape index: {}]
  %s6 = sld [smem:[#allocation0]]
  $region42: #{tpu_custom_call.1} parent=0
    _
  %s8 = ssub.s32 1, %s6
  %s9 = scalar_select 0, %s8, %s6
  $region1: #{tpu_custom_call.1} parent=0
    #allocation2 [shape = 'u8[131072]{0}', space=vmem, size = 0x20000, scoped, tag = 'input window, operand 0, single buffered']
    #allocation3 [shape = 's32[1]{0}', space=sflag, size = 0x4, scoped, tag = 'scoped memory for tpu_custom_call.1']
    #allocation4 [shape = 's32[1]{0}', space=sflag, size = 0x4, scoped, tag = 'scoped memory for tpu_custom_call.1']
    #allocation5 [shape = 'u8[2048]{0}', space=vmem, size = 0x800, scoped, tag = 'input window, operand 1, single buffered']
    #allocation6 [shape = 's32[1]{0}', space=sflag, size = 0x4, scoped, tag = 'scoped memory for tpu_custom_call.1']
    #allocation7 [shape = 'u8[98304]{0}', space=vmem, size = 0x18000, scoped, tag = 'input window, operand 2, single buffered']
    #allocation8 [shape = 'u8[8192]{0}', space=vmem, size = 0x2000, scoped, tag = 'output window, operand 0, single buffered']
    %10 = vsyncpa [#allocation3], 0
    %11 = vsyncpa [#allocation6], 0
    %12 = vsyncpa [#allocation4], 0
    // Predicated region
    $region2: #{tpu_custom_call.1} parent=1 // pred_check
      _
    $region3: #{tpu_custom_call.1} parent=1 // pred_check_branch
      %14 = sbr.rel (0) target = $region5
    $region4: #{tpu_custom_call.1} parent=1 // pred_region
      %s16 = ssub.s32 4096, 4096
      %17 = vsyncadd [#allocation3], %s16
      %s18 = sshll.u32 [#allocation2], 4
      %s19 = int_to_ptr.vmem [resolvable:$true] %s18
      %24 = dma.hbm_to_vmem [thread:$0]  %s0, 4096, %s19, [#allocation3], 64, 64, 4
    $region5: #{tpu_custom_call.1} parent=1 // pred_fallthru
      _
    // Predicated region
    $region6: #{tpu_custom_call.1} parent=1 // pred_check
      _
    $region7: #{tpu_custom_call.1} parent=1 // pred_check_branch
      %26 = sbr.rel (0) target = $region9
    $region8: #{tpu_custom_call.1} parent=1 // pred_region
      %s28 = ssub.s32 64, 64
      %29 = vsyncadd [#allocation6], %s28
      %s31 = sshll.u32 [#allocation5], 4
      %s32 = int_to_ptr.vmem [resolvable:$true] %s31
      %34 = dma.hbm_to_vmem [thread:$0]  %s1, 64, %s32, [#allocation6]
    $region9: #{tpu_custom_call.1} parent=1 // pred_fallthru
      _
    // Predicated region
    $region10: #{tpu_custom_call.1} parent=1 // pred_check
      _
    $region11: #{tpu_custom_call.1} parent=1 // pred_check_branch
      %36 = sbr.rel (0) target = $region13
    $region12: #{tpu_custom_call.1} parent=1 // pred_region
      %s38 = ssub.s32 3072, 3072
      %39 = vsyncadd [#allocation6], %s38
      %s40 = sshll.u32 [#allocation7], 4
      %s41 = int_to_ptr.vmem [resolvable:$true] %s40
      %46 = dma.hbm_to_vmem [thread:$0]  %s2, 3072, %s41, [#allocation6], 64, 64, 4
    $region13: #{tpu_custom_call.1} parent=1 // pred_fallthru
      _
    // Predicated region
    $region14: #{tpu_custom_call.1} parent=1 // pred_check
      _
    $region15: #{tpu_custom_call.1} parent=1 // pred_check_branch
      %48 = sbr.rel (0) target = $region17
    $region16: #{tpu_custom_call.1} parent=1 // pred_region
      _
    $region17: #{tpu_custom_call.1} parent=1 // pred_fallthru
      _
    // Predicated region
    $region18: #{tpu_custom_call.1} parent=1 // pred_check
      _
    $region19: #{tpu_custom_call.1} parent=1 // pred_check_branch
      %50 = sbr.rel (0) target = $region21
    $region20: #{tpu_custom_call.1} parent=1 // pred_region
      _
    $region21: #{tpu_custom_call.1} parent=1 // pred_fallthru
      _
    // Predicated region
    $region22: #{tpu_custom_call.1} parent=1 // pred_check
      _
    $region23: #{tpu_custom_call.1} parent=1 // pred_check_branch
      %52 = sbr.rel (0) target = $region25
    $region24: #{tpu_custom_call.1} parent=1 // pred_region
      %53 = dma.done [#allocation3], 4096
    $region25: #{tpu_custom_call.1} parent=1 // pred_fallthru
      _
    // Predicated region
    $region26: #{tpu_custom_call.1} parent=1 // pred_check
      _
    $region27: #{tpu_custom_call.1} parent=1 // pred_check_branch
      %55 = sbr.rel (0) target = $region29
    $region28: #{tpu_custom_call.1} parent=1 // pred_region
      %56 = dma.done [#allocation6], 64
    $region29: #{tpu_custom_call.1} parent=1 // pred_fallthru
      _
    // Predicated region
    $region30: #{tpu_custom_call.1} parent=1 // pred_check
      _
    $region31: #{tpu_custom_call.1} parent=1 // pred_check_branch
      %58 = sbr.rel (0) target = $region33
    $region32: #{tpu_custom_call.1} parent=1 // pred_region
      %59 = dma.done [#allocation6], 3072
    $region33: #{tpu_custom_call.1} parent=1 // pred_fallthru
      _
    %v61 = vld [vmem:[#allocation5] sm:$0xf]
    %v62 = vld [vmem:[%s3] sm:$0x7]
    %v63 = vld [vmem:[%s4] sm:$0xf]
    %v64 = vld [vmem:[%s4 + $0x4] sm:$0xf]
    %v65 = vld [vmem:[#allocation2] sm:$0xf]
    %v66 = vld [vmem:[#allocation2 + $0x4] sm:$0xf]
    %v67 = vld [vmem:[#allocation2 + $0x8] sm:$0xf]
    %v68 = vld [vmem:[#allocation2 + $0xc] sm:$0xf]
    %v69 = vld [vmem:[#allocation2 + $0x10] sm:$0xf]
    %v70 = vld [vmem:[#allocation2 + $0x14] sm:$0xf]
    %v71 = vld [vmem:[#allocation2 + $0x18] sm:$0xf]
    %v72 = vld [vmem:[#allocation2 + $0x1c] sm:$0xf]
    %v73 = vld [vmem:[#allocation2 + $0x20] sm:$0xf]
    %v74 = vld [vmem:[#allocation2 + $0x24] sm:$0xf]
    %v75 = vld [vmem:[#allocation2 + $0x28] sm:$0xf]
    %v76 = vld [vmem:[#allocation2 + $0x2c] sm:$0xf]
    %v77 = vld [vmem:[#allocation2 + $0x30] sm:$0xf]
    %v78 = vld [vmem:[#allocation2 + $0x34] sm:$0xf]
    %v79 = vld [vmem:[#allocation2 + $0x38] sm:$0xf]
    %v80 = vld [vmem:[#allocation2 + $0x3c] sm:$0xf]
    %v81 = vlaneseq
    %v82 = vshrl.u32 %v81, 7
    %v83 = vsub.s32 0, %v82
    %v84 = vrot.slane %v61, %v83
    %v87 = vunpack.c.l.b16 %v63
    %v88 = vunpack.c.l.b16 %v64
    %v89 = vpack.c.b16 %v88, %v87
    %v107 = vunpack.c.l.b16 %v65
    %v108 = vunpack.c.l.b16 %v66
    %v109 = vunpack.c.l.b16 %v67
    %v110 = vunpack.c.l.b16 %v68
    %v111 = vunpack.c.l.b16 %v69
    %v112 = vunpack.c.l.b16 %v70
    %v113 = vunpack.c.l.b16 %v71
    %v114 = vunpack.c.l.b16 %v72
    %v115 = vunpack.c.l.b16 %v73
    %v116 = vunpack.c.l.b16 %v74
    %v117 = vunpack.c.l.b16 %v75
    %v118 = vunpack.c.l.b16 %v76
    %v119 = vunpack.c.l.b16 %v77
    %v120 = vunpack.c.l.b16 %v78
    %v121 = vunpack.c.l.b16 %v79
    %v122 = vunpack.c.l.b16 %v80
    %v123 = vpack.c.b16 %v108, %v107
    %v124 = vpack.c.b16 %v110, %v109
    %v125 = vpack.c.b16 %v112, %v111
    %v126 = vpack.c.b16 %v114, %v113
    %v127 = vpack.c.b16 %v116, %v115
    %v128 = vpack.c.b16 %v118, %v117
    %v129 = vpack.c.b16 %v120, %v119
    %v130 = vpack.c.b16 %v122, %v121
    %139 = vmatprep.subr.bf16.mxu0 0
    %140 = vmatpush1.bf16.msra.mxu0 %v123
    %141 = vmatprep.subr.bf16.mxu0 0
    %142 = vmatpush1.bf16.msra.mxu0 %v124
    %143 = vmatprep.subr.bf16.mxu0 0
    %144 = vmatpush1.bf16.msra.mxu0 %v125
    %145 = vmatprep.subr.bf16.mxu0 0
    %146 = vmatpush1.bf16.msra.mxu0 %v126
    %147 = vmatprep.subr.bf16.mxu0 0
    %148 = vmatpush1.bf16.msra.mxu0 %v127
    %149 = vmatprep.subr.bf16.mxu0 0
    %150 = vmatpush1.bf16.msra.mxu0 %v128
    %151 = vmatprep.subr.bf16.mxu0 0
    %152 = vmatpush1.bf16.msra.mxu0 %v129
    %153 = vmatprep.subr.bf16.mxu0 0
    %154 = vmatpush1.bf16.msra.mxu0 %v130
    %155 = vmatprep.subr.bf16.mxu0 0
    %156 = vmatpush1.bf16.msra.mxu0 0
    %157 = vmatprep.subr.bf16.mxu0 0
    %158 = vmatpush1.bf16.msra.mxu0 0
    %159 = vmatprep.subr.bf16.mxu0 0
    %160 = vmatpush1.bf16.msra.mxu0 0
    %161 = vmatprep.subr.bf16.mxu0 0
    %162 = vmatpush1.bf16.msra.mxu0 0
    %163 = vmatprep.subr.bf16.mxu0 0
    %164 = vmatpush1.bf16.msra.mxu0 0
    %165 = vmatprep.subr.bf16.mxu0 0
    %166 = vmatpush1.bf16.msra.mxu0 0
    %167 = vmatprep.subr.bf16.mxu0 0
    %168 = vmatpush1.bf16.msra.mxu0 0
    %169 = vmatprep.subr.bf16.mxu0 0
    %170 = vmatpush1.bf16.msra.mxu0 0
    %171 = vmatprep.mubr.bf16.mxu0 0
    %172 = vmatmul.mubr.bf16.gmra.mrb[0].mxu0 %v89
    %v173 = vpop.f32.mrb[0].mxu0
    %v174 = vadd.f32 %v84, %v173
    %v175 = vpop.f32.mrb[0].mxu0
    %v176 = vpop.f32.mrb[0].mxu0
    %v177 = vadd.f32 %v84, %v176
    %v178 = vpop.f32.mrb[0].mxu0
    %179 = vdwg.mxu0
    %v180 = vld [vmem:[#allocation7] sm:$0xf]
    %v181 = vld [vmem:[#allocation7 + $0x4] sm:$0xf]
    %v182 = vld [vmem:[#allocation7 + $0x8] sm:$0xf]
    %v183 = vld [vmem:[#allocation7 + $0xc] sm:$0xf]
    %v184 = vld [vmem:[#allocation7 + $0x10] sm:$0xf]
    %v185 = vld [vmem:[#allocation7 + $0x14] sm:$0xf]
    %v186 = vld [vmem:[#allocation7 + $0x18] sm:$0xf]
    %v187 = vld [vmem:[#allocation7 + $0x1c] sm:$0xf]
    %v188 = vld [vmem:[#allocation7 + $0x20] sm:$0xf]
    %v189 = vld [vmem:[#allocation7 + $0x24] sm:$0xf]
    %v190 = vld [vmem:[#allocation7 + $0x28] sm:$0xf]
    %v191 = vld [vmem:[#allocation7 + $0x2c] sm:$0xf]
    %v192 = vld [vmem:[#allocation7 + $0x30] sm:$0xf]
    %v193 = vld [vmem:[#allocation7 + $0x34] sm:$0xf]
    %v194 = vld [vmem:[#allocation7 + $0x38] sm:$0xf]
    %v195 = vld [vmem:[#allocation7 + $0x3c] sm:$0xf]
    %v196 = vpack.c.bf16 %v177, %v174
    %v197 = vlaneseq
    %v198 = vshrl.u32 %v197, 7
    %v199 = vsub.s32 0, %v198
    %v200 = vrot.slane %v62, %v199
    %v217 = vunpack.c.l.b16 %v180
    %v218 = vunpack.c.l.b16 %v181
    %v219 = vunpack.c.l.b16 %v182
    %v220 = vunpack.c.l.b16 %v183
    %v221 = vunpack.c.l.b16 %v184
    %v222 = vunpack.c.l.b16 %v185
    %v223 = vunpack.c.l.b16 %v186
    %v224 = vunpack.c.l.b16 %v187
    %v225 = vunpack.c.l.b16 %v188
    %v226 = vunpack.c.l.b16 %v189
    %v227 = vunpack.c.l.b16 %v190
    %v228 = vunpack.c.l.b16 %v191
    %v229 = vunpack.c.l.b16 %v192
    %v230 = vunpack.c.l.b16 %v193
    %v231 = vunpack.c.l.b16 %v194
    %v232 = vunpack.c.l.b16 %v195
    %v233 = vpack.c.b16 %v218, %v217
    %v234 = vpack.c.b16 %v220, %v219
    %v235 = vpack.c.b16 %v222, %v221
    %v236 = vpack.c.b16 %v224, %v223
    %v237 = vpack.c.b16 %v226, %v225
    %v238 = vpack.c.b16 %v228, %v227
    %v239 = vpack.c.b16 %v230, %v229
    %v240 = vpack.c.b16 %v232, %v231
    %249 = vmatprep.subr.bf16.mxu0 0
    %250 = vmatpush1.bf16.msra.mxu0 %v233
    %251 = vmatprep.subr.bf16.mxu0 0
    %252 = vmatpush1.bf16.msra.mxu0 %v234
    %253 = vmatprep.subr.bf16.mxu0 0
    %254 = vmatpush1.bf16.msra.mxu0 %v235
    %255 = vmatprep.subr.bf16.mxu0 0
    %256 = vmatpush1.bf16.msra.mxu0 %v236
    %257 = vmatprep.subr.bf16.mxu0 0
    %258 = vmatpush1.bf16.msra.mxu0 %v237
    %259 = vmatprep.subr.bf16.mxu0 0
    %260 = vmatpush1.bf16.msra.mxu0 %v238
    %261 = vmatprep.subr.bf16.mxu0 0
    %262 = vmatpush1.bf16.msra.mxu0 %v239
    %263 = vmatprep.subr.bf16.mxu0 0
    %264 = vmatpush1.bf16.msra.mxu0 %v240
    %265 = vmatprep.subr.bf16.mxu0 0
    %266 = vmatpush1.bf16.msra.mxu0 0
    %267 = vmatprep.subr.bf16.mxu0 0
    %268 = vmatpush1.bf16.msra.mxu0 0
    %269 = vmatprep.subr.bf16.mxu0 0
    %270 = vmatpush1.bf16.msra.mxu0 0
    %271 = vmatprep.subr.bf16.mxu0 0
    %272 = vmatpush1.bf16.msra.mxu0 0
    %273 = vmatprep.subr.bf16.mxu0 0
    %274 = vmatpush1.bf16.msra.mxu0 0
    %275 = vmatprep.subr.bf16.mxu0 0
    %276 = vmatpush1.bf16.msra.mxu0 0
    %277 = vmatprep.subr.bf16.mxu0 0
    %278 = vmatpush1.bf16.msra.mxu0 0
    %279 = vmatprep.subr.bf16.mxu0 0
    %280 = vmatpush1.bf16.msra.mxu0 0
    %281 = vmatprep.mubr.bf16.mxu0 0
    %282 = vmatmul.mubr.bf16.gmra.mrb[0].mxu0 %v196
    %v283 = vpop.f32.mrb[0].mxu0
    %v284 = vadd.f32 %v200, %v283
    %v285 = vpop.f32.mrb[0].mxu0
    %v286 = vpop.f32.mrb[0].mxu0
    %v287 = vadd.f32 %v200, %v286
    %v288 = vpop.f32.mrb[0].mxu0
    %289 = vdwg.mxu0
    %v290 = vmax.f32 %v284, 0.0
    %v291 = vmax.f32 %v287, 0.0
    %s292 = scalar_lea.vmem [#allocation2], 64
    %v293 = vld [vmem:[%s292] sm:$0xf]
    %v294 = vld [vmem:[%s292 + $0x4] sm:$0xf]
    %v295 = vld [vmem:[%s292 + $0x8] sm:$0xf]
    %v296 = vld [vmem:[%s292 + $0xc] sm:$0xf]
    %v297 = vld [vmem:[%s292 + $0x10] sm:$0xf]
    %v298 = vld [vmem:[%s292 + $0x14] sm:$0xf]
    %v299 = vld [vmem:[%s292 + $0x18] sm:$0xf]
    %v300 = vld [vmem:[%s292 + $0x1c] sm:$0xf]
    %v301 = vld [vmem:[%s292 + $0x20] sm:$0xf]
    %v302 = vld [vmem:[%s292 + $0x24] sm:$0xf]
    %v303 = vld [vmem:[%s292 + $0x28] sm:$0xf]
    %v304 = vld [vmem:[%s292 + $0x2c] sm:$0xf]
    %v305 = vld [vmem:[%s292 + $0x30] sm:$0xf]
    %v306 = vld [vmem:[%s292 + $0x34] sm:$0xf]
    %v307 = vld [vmem:[%s292 + $0x38] sm:$0xf]
    %v308 = vld [vmem:[%s292 + $0x3c] sm:$0xf]
    %v309 = vpack.c.bf16 %v291, %v290
    %v310 = vlaneseq
    %v311 = vshrl.u32 %v310, 7
    %v312 = vsub.s32 1, %v311
    %v313 = vrot.slane %v61, %v312
    %v330 = vunpack.c.l.b16 %v293
    %v331 = vunpack.c.l.b16 %v294
    %v332 = vunpack.c.l.b16 %v295
    %v333 = vunpack.c.l.b16 %v296
    %v334 = vunpack.c.l.b16 %v297
    %v335 = vunpack.c.l.b16 %v298
    %v336 = vunpack.c.l.b16 %v299
    %v337 = vunpack.c.l.b16 %v300
    %v338 = vunpack.c.l.b16 %v301
    %v339 = vunpack.c.l.b16 %v302
    %v340 = vunpack.c.l.b16 %v303
    %v341 = vunpack.c.l.b16 %v304
    %v342 = vunpack.c.l.b16 %v305
    %v343 = vunpack.c.l.b16 %v306
    %v344 = vunpack.c.l.b16 %v307
    %v345 = vunpack.c.l.b16 %v308
    %v346 = vpack.c.b16 %v331, %v330
    %v347 = vpack.c.b16 %v333, %v332
    %v348 = vpack.c.b16 %v335, %v334
    %v349 = vpack.c.b16 %v337, %v336
    %v350 = vpack.c.b16 %v339, %v338
    %v351 = vpack.c.b16 %v341, %v340
    %v352 = vpack.c.b16 %v343, %v342
    %v353 = vpack.c.b16 %v345, %v344
    %362 = vmatprep.subr.bf16.mxu0 0
    %363 = vmatpush1.bf16.msra.mxu0 %v346
    %364 = vmatprep.subr.bf16.mxu0 0
    %365 = vmatpush1.bf16.msra.mxu0 %v347
    %366 = vmatprep.subr.bf16.mxu0 0
    %367 = vmatpush1.bf16.msra.mxu0 %v348
    %368 = vmatprep.subr.bf16.mxu0 0
    %369 = vmatpush1.bf16.msra.mxu0 %v349
    %370 = vmatprep.subr.bf16.mxu0 0
    %371 = vmatpush1.bf16.msra.mxu0 %v350
    %372 = vmatprep.subr.bf16.mxu0 0
    %373 = vmatpush1.bf16.msra.mxu0 %v351
    %374 = vmatprep.subr.bf16.mxu0 0
    %375 = vmatpush1.bf16.msra.mxu0 %v352
    %376 = vmatprep.subr.bf16.mxu0 0
    %377 = vmatpush1.bf16.msra.mxu0 %v353
    %378 = vmatprep.subr.bf16.mxu0 0
    %379 = vmatpush1.bf16.msra.mxu0 0
    %380 = vmatprep.subr.bf16.mxu0 0
    %381 = vmatpush1.bf16.msra.mxu0 0
    %382 = vmatprep.subr.bf16.mxu0 0
    %383 = vmatpush1.bf16.msra.mxu0 0
    %384 = vmatprep.subr.bf16.mxu0 0
    %385 = vmatpush1.bf16.msra.mxu0 0
    %386 = vmatprep.subr.bf16.mxu0 0
    %387 = vmatpush1.bf16.msra.mxu0 0
    %388 = vmatprep.subr.bf16.mxu0 0
    %389 = vmatpush1.bf16.msra.mxu0 0
    %390 = vmatprep.subr.bf16.mxu0 0
    %391 = vmatpush1.bf16.msra.mxu0 0
    %392 = vmatprep.subr.bf16.mxu0 0
    %393 = vmatpush1.bf16.msra.mxu0 0
    %394 = vmatprep.mubr.bf16.mxu0 0
    %395 = vmatmul.mubr.bf16.gmra.mrb[0].mxu0 %v309
    %v396 = vpop.f32.mrb[0].mxu0
    %v397 = vadd.f32 %v313, %v396
    %v398 = vpop.f32.mrb[0].mxu0
    %v399 = vpop.f32.mrb[0].mxu0
    %v400 = vadd.f32 %v313, %v399
    %v401 = vpop.f32.mrb[0].mxu0
    %402 = vdwg.mxu0
    %s403 = scalar_lea.vmem [#allocation7], 64
    %v404 = vld [vmem:[%s403] sm:$0xf]
    %v405 = vld [vmem:[%s403 + $0x4] sm:$0xf]
    %v406 = vld [vmem:[%s403 + $0x8] sm:$0xf]
    %v407 = vld [vmem:[%s403 + $0xc] sm:$0xf]
    %v408 = vld [vmem:[%s403 + $0x10] sm:$0xf]
    %v409 = vld [vmem:[%s403 + $0x14] sm:$0xf]
    %v410 = vld [vmem:[%s403 + $0x18] sm:$0xf]
    %v411 = vld [vmem:[%s403 + $0x1c] sm:$0xf]
    %v412 = vld [vmem:[%s403 + $0x20] sm:$0xf]
    %v413 = vld [vmem:[%s403 + $0x24] sm:$0xf]
    %v414 = vld [vmem:[%s403 + $0x28] sm:$0xf]
    %v415 = vld [vmem:[%s403 + $0x2c] sm:$0xf]
    %v416 = vld [vmem:[%s403 + $0x30] sm:$0xf]
    %v417 = vld [vmem:[%s403 + $0x34] sm:$0xf]
    %v418 = vld [vmem:[%s403 + $0x38] sm:$0xf]
    %v419 = vld [vmem:[%s403 + $0x3c] sm:$0xf]
    %v420 = vpack.c.bf16 %v400, %v397
    %v421 = vlaneseq
    %v422 = vshrl.u32 %v421, 7
    %v423 = vsub.s32 1, %v422
    %v424 = vrot.slane %v62, %v423
    %v441 = vunpack.c.l.b16 %v404
    %v442 = vunpack.c.l.b16 %v405
    %v443 = vunpack.c.l.b16 %v406
    %v444 = vunpack.c.l.b16 %v407
    %v445 = vunpack.c.l.b16 %v408
    %v446 = vunpack.c.l.b16 %v409
    %v447 = vunpack.c.l.b16 %v410
    %v448 = vunpack.c.l.b16 %v411
    %v449 = vunpack.c.l.b16 %v412
    %v450 = vunpack.c.l.b16 %v413
    %v451 = vunpack.c.l.b16 %v414
    %v452 = vunpack.c.l.b16 %v415
    %v453 = vunpack.c.l.b16 %v416
    %v454 = vunpack.c.l.b16 %v417
    %v455 = vunpack.c.l.b16 %v418
    %v456 = vunpack.c.l.b16 %v419
    %v457 = vpack.c.b16 %v442, %v441
    %v458 = vpack.c.b16 %v444, %v443
    %v459 = vpack.c.b16 %v446, %v445
    %v460 = vpack.c.b16 %v448, %v447
    %v461 = vpack.c.b16 %v450, %v449
    %v462 = vpack.c.b16 %v452, %v451
    %v463 = vpack.c.b16 %v454, %v453
    %v464 = vpack.c.b16 %v456, %v455
    %473 = vmatprep.subr.bf16.mxu0 0
    %474 = vmatpush1.bf16.msra.mxu0 %v457
    %475 = vmatprep.subr.bf16.mxu0 0
    %476 = vmatpush1.bf16.msra.mxu0 %v458
    %477 = vmatprep.subr.bf16.mxu0 0
    %478 = vmatpush1.bf16.msra.mxu0 %v459
    %479 = vmatprep.subr.bf16.mxu0 0
    %480 = vmatpush1.bf16.msra.mxu0 %v460
    %481 = vmatprep.subr.bf16.mxu0 0
    %482 = vmatpush1.bf16.msra.mxu0 %v461
    %483 = vmatprep.subr.bf16.mxu0 0
    %484 = vmatpush1.bf16.msra.mxu0 %v462
    %485 = vmatprep.subr.bf16.mxu0 0
    %486 = vmatpush1.bf16.msra.mxu0 %v463
    %487 = vmatprep.subr.bf16.mxu0 0
    %488 = vmatpush1.bf16.msra.mxu0 %v464
    %489 = vmatprep.subr.bf16.mxu0 0
    %490 = vmatpush1.bf16.msra.mxu0 0
    %491 = vmatprep.subr.bf16.mxu0 0
    %492 = vmatpush1.bf16.msra.mxu0 0
    %493 = vmatprep.subr.bf16.mxu0 0
    %494 = vmatpush1.bf16.msra.mxu0 0
    %495 = vmatprep.subr.bf16.mxu0 0
    %496 = vmatpush1.bf16.msra.mxu0 0
    %497 = vmatprep.subr.bf16.mxu0 0
    %498 = vmatpush1.bf16.msra.mxu0 0
    %499 = vmatprep.subr.bf16.mxu0 0
    %500 = vmatpush1.bf16.msra.mxu0 0
    %501 = vmatprep.subr.bf16.mxu0 0
    %502 = vmatpush1.bf16.msra.mxu0 0
    %503 = vmatprep.subr.bf16.mxu0 0
    %504 = vmatpush1.bf16.msra.mxu0 0
    %505 = vmatprep.mubr.bf16.mxu0 0
    %506 = vmatmul.mubr.bf16.gmra.mrb[0].mxu0 %v420
    %v507 = vpop.f32.mrb[0].mxu0
    %v508 = vadd.f32 %v424, %v507
    %v509 = vpop.f32.mrb[0].mxu0
    %v510 = vpop.f32.mrb[0].mxu0
    %v511 = vadd.f32 %v424, %v510
    %v512 = vpop.f32.mrb[0].mxu0
    %513 = vdwg.mxu0
    %v514 = vmax.f32 %v508, 0.0
    %v515 = vmax.f32 %v511, 0.0
    %s516 = scalar_lea.vmem [#allocation2], 128
    %v517 = vld [vmem:[%s516] sm:$0xf]
    %v518 = vld [vmem:[%s516 + $0x4] sm:$0xf]
    %v519 = vld [vmem:[%s516 + $0x8] sm:$0xf]
    %v520 = vld [vmem:[%s516 + $0xc] sm:$0xf]
    %v521 = vld [vmem:[%s516 + $0x10] sm:$0xf]
    %v522 = vld [vmem:[%s516 + $0x14] sm:$0xf]
    %v523 = vld [vmem:[%s516 + $0x18] sm:$0xf]
    %v524 = vld [vmem:[%s516 + $0x1c] sm:$0xf]
    %v525 = vld [vmem:[%s516 + $0x20] sm:$0xf]
    %v526 = vld [vmem:[%s516 + $0x24] sm:$0xf]
    %v527 = vld [vmem:[%s516 + $0x28] sm:$0xf]
    %v528 = vld [vmem:[%s516 + $0x2c] sm:$0xf]
    %v529 = vld [vmem:[%s516 + $0x30] sm:$0xf]
    %v530 = vld [vmem:[%s516 + $0x34] sm:$0xf]
    %v531 = vld [vmem:[%s516 + $0x38] sm:$0xf]
    %v532 = vld [vmem:[%s516 + $0x3c] sm:$0xf]
    %v533 = vpack.c.bf16 %v515, %v514
    %v534 = vlaneseq
    %v535 = vshrl.u32 %v534, 7
    %v536 = vsub.s32 2, %v535
    %v537 = vrot.slane %v61, %v536
    %v554 = vunpack.c.l.b16 %v517
    %v555 = vunpack.c.l.b16 %v518
    %v556 = vunpack.c.l.b16 %v519
    %v557 = vunpack.c.l.b16 %v520
    %v558 = vunpack.c.l.b16 %v521
    %v559 = vunpack.c.l.b16 %v522
    %v560 = vunpack.c.l.b16 %v523
    %v561 = vunpack.c.l.b16 %v524
    %v562 = vunpack.c.l.b16 %v525
    %v563 = vunpack.c.l.b16 %v526
    %v564 = vunpack.c.l.b16 %v527
    %v565 = vunpack.c.l.b16 %v528
    %v566 = vunpack.c.l.b16 %v529
    %v567 = vunpack.c.l.b16 %v530
    %v568 = vunpack.c.l.b16 %v531
    %v569 = vunpack.c.l.b16 %v532
    %v570 = vpack.c.b16 %v555, %v554
    %v571 = vpack.c.b16 %v557, %v556
    %v572 = vpack.c.b16 %v559, %v558
    %v573 = vpack.c.b16 %v561, %v560
    %v574 = vpack.c.b16 %v563, %v562
    %v575 = vpack.c.b16 %v565, %v564
    %v576 = vpack.c.b16 %v567, %v566
    %v577 = vpack.c.b16 %v569, %v568
    %586 = vmatprep.subr.bf16.mxu0 0
    %587 = vmatpush1.bf16.msra.mxu0 %v570
    %588 = vmatprep.subr.bf16.mxu0 0
    %589 = vmatpush1.bf16.msra.mxu0 %v571
    %590 = vmatprep.subr.bf16.mxu0 0
    %591 = vmatpush1.bf16.msra.mxu0 %v572
    %592 = vmatprep.subr.bf16.mxu0 0
    %593 = vmatpush1.bf16.msra.mxu0 %v573
    %594 = vmatprep.subr.bf16.mxu0 0
    %595 = vmatpush1.bf16.msra.mxu0 %v574
    %596 = vmatprep.subr.bf16.mxu0 0
    %597 = vmatpush1.bf16.msra.mxu0 %v575
    %598 = vmatprep.subr.bf16.mxu0 0
    %599 = vmatpush1.bf16.msra.mxu0 %v576
    %600 = vmatprep.subr.bf16.mxu0 0
    %601 = vmatpush1.bf16.msra.mxu0 %v577
    %602 = vmatprep.subr.bf16.mxu0 0
    %603 = vmatpush1.bf16.msra.mxu0 0
    %604 = vmatprep.subr.bf16.mxu0 0
    %605 = vmatpush1.bf16.msra.mxu0 0
    %606 = vmatprep.subr.bf16.mxu0 0
    %607 = vmatpush1.bf16.msra.mxu0 0
    %608 = vmatprep.subr.bf16.mxu0 0
    %609 = vmatpush1.bf16.msra.mxu0 0
    %610 = vmatprep.subr.bf16.mxu0 0
    %611 = vmatpush1.bf16.msra.mxu0 0
    %612 = vmatprep.subr.bf16.mxu0 0
    %613 = vmatpush1.bf16.msra.mxu0 0
    %614 = vmatprep.subr.bf16.mxu0 0
    %615 = vmatpush1.bf16.msra.mxu0 0
    %616 = vmatprep.subr.bf16.mxu0 0
    %617 = vmatpush1.bf16.msra.mxu0 0
    %618 = vmatprep.mubr.bf16.mxu0 0
    %619 = vmatmul.mubr.bf16.gmra.mrb[0].mxu0 %v533
    %v620 = vpop.f32.mrb[0].mxu0
    %v621 = vadd.f32 %v537, %v620
    %v622 = vpop.f32.mrb[0].mxu0
    %v623 = vpop.f32.mrb[0].mxu0
    %v624 = vadd.f32 %v537, %v623
    %v625 = vpop.f32.mrb[0].mxu0
    %626 = vdwg.mxu0
    %s627 = scalar_lea.vmem [#allocation7], 128
    %v628 = vld [vmem:[%s627] sm:$0xf]
    %v629 = vld [vmem:[%s627 + $0x4] sm:$0xf]
    %v630 = vld [vmem:[%s627 + $0x8] sm:$0xf]
    %v631 = vld [vmem:[%s627 + $0xc] sm:$0xf]
    %v632 = vld [vmem:[%s627 + $0x10] sm:$0xf]
    %v633 = vld [vmem:[%s627 + $0x14] sm:$0xf]
    %v634 = vld [vmem:[%s627 + $0x18] sm:$0xf]
    %v635 = vld [vmem:[%s627 + $0x1c] sm:$0xf]
    %v636 = vld [vmem:[%s627 + $0x20] sm:$0xf]
    %v637 = vld [vmem:[%s627 + $0x24] sm:$0xf]
    %v638 = vld [vmem:[%s627 + $0x28] sm:$0xf]
    %v639 = vld [vmem:[%s627 + $0x2c] sm:$0xf]
    %v640 = vld [vmem:[%s627 + $0x30] sm:$0xf]
    %v641 = vld [vmem:[%s627 + $0x34] sm:$0xf]
    %v642 = vld [vmem:[%s627 + $0x38] sm:$0xf]
    %v643 = vld [vmem:[%s627 + $0x3c] sm:$0xf]
    %v644 = vpack.c.bf16 %v624, %v621
    %v645 = vlaneseq
    %v646 = vshrl.u32 %v645, 7
    %v647 = vsub.s32 2, %v646
    %v648 = vrot.slane %v62, %v647
    %v665 = vunpack.c.l.b16 %v628
    %v666 = vunpack.c.l.b16 %v629
    %v667 = vunpack.c.l.b16 %v630
    %v668 = vunpack.c.l.b16 %v631
    %v669 = vunpack.c.l.b16 %v632
    %v670 = vunpack.c.l.b16 %v633
    %v671 = vunpack.c.l.b16 %v634
    %v672 = vunpack.c.l.b16 %v635
    %v673 = vunpack.c.l.b16 %v636
    %v674 = vunpack.c.l.b16 %v637
    %v675 = vunpack.c.l.b16 %v638
    %v676 = vunpack.c.l.b16 %v639
    %v677 = vunpack.c.l.b16 %v640
    %v678 = vunpack.c.l.b16 %v641
    %v679 = vunpack.c.l.b16 %v642
    %v680 = vunpack.c.l.b16 %v643
    %v681 = vpack.c.b16 %v666, %v665
    %v682 = vpack.c.b16 %v668, %v667
    %v683 = vpack.c.b16 %v670, %v669
    %v684 = vpack.c.b16 %v672, %v671
    %v685 = vpack.c.b16 %v674, %v673
    %v686 = vpack.c.b16 %v676, %v675
    %v687 = vpack.c.b16 %v678, %v677
    %v688 = vpack.c.b16 %v680, %v679
    %697 = vmatprep.subr.bf16.mxu0 0
    %698 = vmatpush1.bf16.msra.mxu0 %v681
    %699 = vmatprep.subr.bf16.mxu0 0
    %700 = vmatpush1.bf16.msra.mxu0 %v682
    %701 = vmatprep.subr.bf16.mxu0 0
    %702 = vmatpush1.bf16.msra.mxu0 %v683
    %703 = vmatprep.subr.bf16.mxu0 0
    %704 = vmatpush1.bf16.msra.mxu0 %v684
    %705 = vmatprep.subr.bf16.mxu0 0
    %706 = vmatpush1.bf16.msra.mxu0 %v685
    %707 = vmatprep.subr.bf16.mxu0 0
    %708 = vmatpush1.bf16.msra.mxu0 %v686
    %709 = vmatprep.subr.bf16.mxu0 0
    %710 = vmatpush1.bf16.msra.mxu0 %v687
    %711 = vmatprep.subr.bf16.mxu0 0
    %712 = vmatpush1.bf16.msra.mxu0 %v688
    %713 = vmatprep.subr.bf16.mxu0 0
    %714 = vmatpush1.bf16.msra.mxu0 0
    %715 = vmatprep.subr.bf16.mxu0 0
    %716 = vmatpush1.bf16.msra.mxu0 0
    %717 = vmatprep.subr.bf16.mxu0 0
    %718 = vmatpush1.bf16.msra.mxu0 0
    %719 = vmatprep.subr.bf16.mxu0 0
    %720 = vmatpush1.bf16.msra.mxu0 0
    %721 = vmatprep.subr.bf16.mxu0 0
    %722 = vmatpush1.bf16.msra.mxu0 0
    %723 = vmatprep.subr.bf16.mxu0 0
    %724 = vmatpush1.bf16.msra.mxu0 0
    %725 = vmatprep.subr.bf16.mxu0 0
    %726 = vmatpush1.bf16.msra.mxu0 0
    %727 = vmatprep.subr.bf16.mxu0 0
    %728 = vmatpush1.bf16.msra.mxu0 0
    %729 = vmatprep.mubr.bf16.mxu0 0
    %730 = vmatmul.mubr.bf16.gmra.mrb[0].mxu0 %v644
    %v731 = vpop.f32.mrb[0].mxu0
    %v732 = vadd.f32 %v648, %v731
    %v733 = vpop.f32.mrb[0].mxu0
    %v734 = vpop.f32.mrb[0].mxu0
    %v735 = vadd.f32 %v648, %v734
    %v736 = vpop.f32.mrb[0].mxu0
    %737 = vdwg.mxu0
    %v738 = vmax.f32 %v732, 0.0
    %v739 = vmax.f32 %v735, 0.0
    %s740 = scalar_lea.vmem [#allocation2], 192
    %v741 = vld [vmem:[%s740] sm:$0xf]
    %v742 = vld [vmem:[%s740 + $0x4] sm:$0xf]
    %v743 = vld [vmem:[%s740 + $0x8] sm:$0xf]
    %v744 = vld [vmem:[%s740 + $0xc] sm:$0xf]
    %v745 = vld [vmem:[%s740 + $0x10] sm:$0xf]
    %v746 = vld [vmem:[%s740 + $0x14] sm:$0xf]
    %v747 = vld [vmem:[%s740 + $0x18] sm:$0xf]
    %v748 = vld [vmem:[%s740 + $0x1c] sm:$0xf]
    %v749 = vld [vmem:[%s740 + $0x20] sm:$0xf]
    %v750 = vld [vmem:[%s740 + $0x24] sm:$0xf]
    %v751 = vld [vmem:[%s740 + $0x28] sm:$0xf]
    %v752 = vld [vmem:[%s740 + $0x2c] sm:$0xf]
    %v753 = vld [vmem:[%s740 + $0x30] sm:$0xf]
    %v754 = vld [vmem:[%s740 + $0x34] sm:$0xf]
    %v755 = vld [vmem:[%s740 + $0x38] sm:$0xf]
    %v756 = vld [vmem:[%s740 + $0x3c] sm:$0xf]
    %v757 = vpack.c.bf16 %v739, %v738
    %v758 = vlaneseq
    %v759 = vshrl.u32 %v758, 7
    %v760 = vsub.s32 3, %v759
    %v761 = vrot.slane %v61, %v760
    %v778 = vunpack.c.l.b16 %v741
    %v779 = vunpack.c.l.b16 %v742
    %v780 = vunpack.c.l.b16 %v743
    %v781 = vunpack.c.l.b16 %v744
    %v782 = vunpack.c.l.b16 %v745
    %v783 = vunpack.c.l.b16 %v746
    %v784 = vunpack.c.l.b16 %v747
    %v785 = vunpack.c.l.b16 %v748
    %v786 = vunpack.c.l.b16 %v749
    %v787 = vunpack.c.l.b16 %v750
    %v788 = vunpack.c.l.b16 %v751
    %v789 = vunpack.c.l.b16 %v752
    %v790 = vunpack.c.l.b16 %v753
    %v791 = vunpack.c.l.b16 %v754
    %v792 = vunpack.c.l.b16 %v755
    %v793 = vunpack.c.l.b16 %v756
    %v794 = vpack.c.b16 %v779, %v778
    %v795 = vpack.c.b16 %v781, %v780
    %v796 = vpack.c.b16 %v783, %v782
    %v797 = vpack.c.b16 %v785, %v784
    %v798 = vpack.c.b16 %v787, %v786
    %v799 = vpack.c.b16 %v789, %v788
    %v800 = vpack.c.b16 %v791, %v790
    %v801 = vpack.c.b16 %v793, %v792
    %810 = vmatprep.subr.bf16.mxu0 0
    %811 = vmatpush1.bf16.msra.mxu0 %v794
    %812 = vmatprep.subr.bf16.mxu0 0
    %813 = vmatpush1.bf16.msra.mxu0 %v795
    %814 = vmatprep.subr.bf16.mxu0 0
    %815 = vmatpush1.bf16.msra.mxu0 %v796
    %816 = vmatprep.subr.bf16.mxu0 0
    %817 = vmatpush1.bf16.msra.mxu0 %v797
    %818 = vmatprep.subr.bf16.mxu0 0
    %819 = vmatpush1.bf16.msra.mxu0 %v798
    %820 = vmatprep.subr.bf16.mxu0 0
    %821 = vmatpush1.bf16.msra.mxu0 %v799
    %822 = vmatprep.subr.bf16.mxu0 0
    %823 = vmatpush1.bf16.msra.mxu0 %v800
    %824 = vmatprep.subr.bf16.mxu0 0
    %825 = vmatpush1.bf16.msra.mxu0 %v801
    %826 = vmatprep.subr.bf16.mxu0 0
    %827 = vmatpush1.bf16.msra.mxu0 0
    %828 = vmatprep.subr.bf16.mxu0 0
    %829 = vmatpush1.bf16.msra.mxu0 0
    %830 = vmatprep.subr.bf16.mxu0 0
    %831 = vmatpush1.bf16.msra.mxu0 0
    %832 = vmatprep.subr.bf16.mxu0 0
    %833 = vmatpush1.bf16.msra.mxu0 0
    %834 = vmatprep.subr.bf16.mxu0 0
    %835 = vmatpush1.bf16.msra.mxu0 0
    %836 = vmatprep.subr.bf16.mxu0 0
    %837 = vmatpush1.bf16.msra.mxu0 0
    %838 = vmatprep.subr.bf16.mxu0 0
    %839 = vmatpush1.bf16.msra.mxu0 0
    %840 = vmatprep.subr.bf16.mxu0 0
    %841 = vmatpush1.bf16.msra.mxu0 0
    %842 = vmatprep.mubr.bf16.mxu0 0
    %843 = vmatmul.mubr.bf16.gmra.mrb[0].mxu0 %v757
    %v844 = vpop.f32.mrb[0].mxu0
    %v845 = vadd.f32 %v761, %v844
    %v846 = vpop.f32.mrb[0].mxu0
    %v847 = vpop.f32.mrb[0].mxu0
    %v848 = vadd.f32 %v761, %v847
    %v849 = vpop.f32.mrb[0].mxu0
    %850 = vdwg.mxu0
    %851 = vst [vmem:[#allocation8] sm:$0xff] %v845
    %852 = vst [vmem:[#allocation8 + $0x8] sm:$0xff] %v848
    // Predicated region
    $region34: #{tpu_custom_call.1} parent=1 // pred_check
      _
    $region35: #{tpu_custom_call.1} parent=1 // pred_check_branch
      %854 = sbr.rel (0) target = $region37
    $region36: #{tpu_custom_call.1} parent=1 // pred_region
      %s856 = ssub.s32 256, 256
      %857 = vsyncadd [#allocation4], %s856
      %s858 = sshll.u32 [#allocation8], 4
      %s859 = int_to_ptr.vmem [resolvable:$true] %s858
      %864 = dma.vmem_to_hbm [thread:$0]  %s859, 256, %s5, [#allocation4], 128, 128, 8
    $region37: #{tpu_custom_call.1} parent=1 // pred_fallthru
      _
    // Predicated region
    $region38: #{tpu_custom_call.1} parent=1 // pred_check
      _
    $region39: #{tpu_custom_call.1} parent=1 // pred_check_branch
      %866 = sbr.rel (0) target = $region41
    $region40: #{tpu_custom_call.1} parent=1 // pred_region
      %867 = dma.done [#allocation4], 256
    $region41: #{tpu_custom_call.1} parent=1 // pred_fallthru
      _
    %868 = vsyncpa [#allocation3], 1
    %869 = vsyncpa [#allocation6], 1
    %870 = vsyncpa [#allocation4], 1

</llo_original>
